<compile_context>
chip_gen: v6e
topology: v6e:2x2x1
jax: 0.10.0
libtpu: 0.0.40
codegen_flags: <defaults>
</compile_context>

<pallas_src>
import jax
import jax.numpy as jnp
from jax.experimental import pallas as pl
from jax.experimental.pallas import tpu as pltpu

HIDDEN = 128
_LANE = 128
_SUBLANE = 8


def _round_up(n, m):
    return ((n + m - 1) // m) * m


def _disc_kernel(x_ref, w1_ref, b1_ref, w2_ref, b2_ref, o_ref):
    # Layer 1: Linear(img_dim -> 128) on the MXU (bf16 operands, f32 accumulate).
    h = jnp.dot(x_ref[...], w1_ref[...], preferred_element_type=jnp.float32)
    h = h + b1_ref[...]                      # (TB, 128) + (1, 128)
    # LeakyReLU(negative_slope=0.1) on the VPU.
    h = jnp.where(h > 0, h, 0.1 * h)
    # Layer 2: Linear(128 -> 1) as VPU multiply + XLU cross-lane reduce
    # (avoids an N=1 MXU matmul).
    y = jnp.sum(h * w2_ref[...], axis=-1, keepdims=True) + b2_ref[...]  # (TB, 1)
    # Sigmoid: exp on the EUP, approximate reciprocal on the EUP.
    sig = pl.reciprocal(1.0 + jnp.exp(-y), approx=True)                 # (TB, 1)
    # Lane-dense store: batch maps to the lane dimension of the output block.
    o_ref[...] = sig.reshape(o_ref.shape)                               # (1, TB)


def discriminator_forward(x, w1, b1, w2, b2, *, block_b=512):
    """x: (B, img_dim) float32; returns (B, 1) float32 — matches PyTorch Discriminator."""
    B, D = x.shape
    D_pad = _round_up(D, _LANE)

    # Batch tile: single full-batch tile for small B (latency-floor regime),
    # otherwise 512-row tiles (multiple of 128 so output blocks stay lane-dense
    # and well under v7x's 64 MiB VMEM even double-buffered).
    if B <= block_b:
        TB = _round_up(B, _SUBLANE)
        B_pad = TB
    else:
        TB = block_b
        B_pad = _round_up(B, TB)
    grid = (B_pad // TB,)

    # bf16 for the two dominant HBM streams (memory-bound kernel); everything
    # else stays f32.
    x_p = jnp.pad(x, ((0, B_pad - B), (0, D_pad - D))).astype(jnp.bfloat16)
    w1_p = jnp.pad(w1, ((0, D_pad - D), (0, 0))).astype(jnp.bfloat16)
    b1_2d = b1.reshape(1, HIDDEN).astype(jnp.float32)
    w2_row = w2.reshape(1, HIDDEN).astype(jnp.float32)
    b2_2d = b2.reshape(1, 1).astype(jnp.float32)

    cost = pl.CostEstimate(
        flops=2 * B_pad * (D_pad * HIDDEN + HIDDEN),
        transcendentals=2 * B_pad,  # exp + reciprocal per row
        bytes_accessed=(x_p.size * 2 + w1_p.size * 2
                        + (2 * HIDDEN + 1) * 4 + B_pad * 4),
    )

    out = pl.pallas_call(
        _disc_kernel,
        out_shape=jax.ShapeDtypeStruct((1, B_pad), jnp.float32),
        grid=grid,
        in_specs=[
            pl.BlockSpec((TB, D_pad), lambda i: (i, 0)),       # x tile (streams)
            pl.BlockSpec((D_pad, HIDDEN), lambda i: (0, 0)),   # W1 (VMEM-resident)
            pl.BlockSpec((1, HIDDEN), lambda i: (0, 0)),       # b1
            pl.BlockSpec((1, HIDDEN), lambda i: (0, 0)),       # w2 as a row vector
            pl.BlockSpec((1, 1), lambda i: (0, 0)),            # b2
        ],
        out_specs=pl.BlockSpec((1, TB), lambda i: (0, i)),     # lane-dense output
        compiler_params=pltpu.CompilerParams(
            dimension_semantics=("parallel",),
        ),
        cost_estimate=cost,
    )(x_p, w1_p, b1_2d, w2_row, b2_2d)

    # (1, B_pad) lane-major -> (B, 1), dropping padded rows.
    return out.reshape(B_pad, 1)[:B]


def init_params(key, img_dim):
    """Deterministic init matching PyTorch nn.Linear default:
    U(-1/sqrt(fan_in), 1/sqrt(fan_in)) for weights and biases."""
    k1, k2, k3, k4 = jax.random.split(key, 4)
    bound1 = 1.0 / jnp.sqrt(img_dim)
    w1 = jax.random.uniform(k1, (img_dim, HIDDEN), jnp.float32, -bound1, bound1)
    b1 = jax.random.uniform(k2, (HIDDEN,), jnp.float32, -bound1, bound1)
    bound2 = 1.0 / jnp.sqrt(HIDDEN)
    w2 = jax.random.uniform(k3, (HIDDEN, 1), jnp.float32, -bound2, bound2)
    b2 = jax.random.uniform(k4, (1,), jnp.float32, -bound2, bound2)
    return w1, b1, w2, b2


def reference_forward(x, w1, b1, w2, b2):
    """Pure-f32 reference matching the PyTorch module exactly."""
    h = x @ w1 + b1
    h = jnp.where(h > 0, h, 0.1 * h)
    return jax.nn.sigmoid(h @ w2 + b2)


def reference_forward_matched(x, w1, b1, w2, b2):
    """Reference with the same bf16 MXU-operand cast as the kernel."""
    h = jnp.dot(x.astype(jnp.bfloat16), w1.astype(jnp.bfloat16),
                preferred_element_type=jnp.float32) + b1
    h = jnp.where(h > 0, h, 0.1 * h)
    return jax.nn.sigmoid(h @ w2 + b2)


if __name__ == "__main__":
    key = jax.random.PRNGKey(0)
    kx, kp, kx2 = jax.random.split(key, 3)

    IMG_DIM = 784  # flattened 28x28 image, as in the simple GAN
    w1, b1, w2, b2 = init_params(kp, IMG_DIM)

    # Small batch: single tile (latency-floor regime).
    x_small = jax.random.normal(kx, (8, IMG_DIM), dtype=jnp.float32)
    out_small = jax.block_until_ready(discriminator_forward(x_small, w1, b1, w2, b2))

    # Larger, non-multiple batch: exercises the tiled grid and ragged padding.
    x_big = jax.random.normal(kx2, (1100, IMG_DIM), dtype=jnp.float32)
    out_big = jax.block_until_ready(discriminator_forward(x_big, w1, b1, w2, b2))

    for x, out in ((x_small, out_small), (x_big, out_big)):
        assert out.shape == (x.shape[0], 1)
        ref_match = reference_forward_matched(x, w1, b1, w2, b2)
        ref_f32 = reference_forward(x, w1, b1, w2, b2)
        # Matched-precision reference: only accumulation order + approx recip differ.
        assert jnp.allclose(out, ref_match, atol=1e-2), \
            float(jnp.max(jnp.abs(out - ref_match)))
        # Full-f32 module semantics: loose tolerance for the bf16 input cast.
        assert jnp.allclose(out, ref_f32, atol=5e-2), \
            float(jnp.max(jnp.abs(out - ref_f32)))

    print("KERNEL_OK")
</pallas_src>

<mosaic_0001>
module attributes {stable_mosaic.version = 11 : i64} {
  func.func @_disc_kernel(%arg0: i32, %arg1: memref<8x896xbf16, #tpu.memory_space<vmem>>, %arg2: memref<896x128xbf16, #tpu.memory_space<vmem>>, %arg3: memref<1x128xf32, #tpu.memory_space<vmem>>, %arg4: memref<1x128xf32, #tpu.memory_space<vmem>>, %arg5: memref<1x1xf32, #tpu.memory_space<vmem>>, %arg6: memref<1x8xf32, #tpu.memory_space<vmem>>) attributes {dimension_semantics = [#tpu.dimension_semantics<parallel>], iteration_bounds = array<i64: 1>, scalar_prefetch = 0 : i64, scratch_operands = 0 : i64, tpu.core_type = #tpu.core_type<tc>, window_params = [{transform_indices = @transform_0, window_bounds = array<i64: 8, 896>}, {pipeline_mode = #tpu.pipeline_mode<synchronous>, transform_indices = @transform_1, window_bounds = array<i64: 896, 128>}, {pipeline_mode = #tpu.pipeline_mode<synchronous>, transform_indices = @transform_2, window_bounds = array<i64: 1, 128>}, {pipeline_mode = #tpu.pipeline_mode<synchronous>, transform_indices = @transform_3, window_bounds = array<i64: 1, 128>}, {pipeline_mode = #tpu.pipeline_mode<synchronous>, transform_indices = @transform_4, window_bounds = array<i64: 1, 1>}, {transform_indices = @transform_5, window_bounds = array<i64: 1, 8>}]} {
    %c0 = arith.constant 0 : index
    %c0_0 = arith.constant 0 : index
    %0 = vector.load %arg1[%c0, %c0_0] : memref<8x896xbf16, #tpu.memory_space<vmem>>, vector<8x896xbf16>
    %c0_1 = arith.constant 0 : index
    %c0_2 = arith.constant 0 : index
    %1 = vector.load %arg2[%c0_1, %c0_2] : memref<896x128xbf16, #tpu.memory_space<vmem>>, vector<896x128xbf16>
    %cst = arith.constant dense<0.000000e+00> : vector<8x128xf32>
    %2 = tpu.matmul %0, %1, %cst {dimension_numbers = #tpu.dot_dimension_numbers<[1], [0], [0], [1], [0, 0, 1, 1], [], []>} : vector<8x896xbf16>, vector<896x128xbf16>, vector<8x128xf32> -> vector<8x128xf32>
    %c0_3 = arith.constant 0 : index
    %c0_4 = arith.constant 0 : index
    %3 = vector.load %arg3[%c0_3, %c0_4] : memref<1x128xf32, #tpu.memory_space<vmem>>, vector<1x128xf32>
    %4 = vector.broadcast %3 : vector<1x128xf32> to vector<8x128xf32>
    %5 = arith.addf %2, %4 : vector<8x128xf32>
    %cst_5 = arith.constant 0.000000e+00 : f32
    %6 = vector.broadcast %cst_5 : f32 to vector<8x128xf32>
    %7 = arith.cmpf ogt, %5, %6 : vector<8x128xf32>
    %cst_6 = arith.constant 1.000000e-01 : f32
    %8 = vector.broadcast %cst_6 : f32 to vector<8x128xf32>
    %9 = arith.mulf %8, %5 : vector<8x128xf32>
    %10 = arith.select %7, %5, %9 : vector<8x128xi1>, vector<8x128xf32>
    %c0_7 = arith.constant 0 : index
    %c0_8 = arith.constant 0 : index
    %11 = vector.load %arg4[%c0_7, %c0_8] : memref<1x128xf32, #tpu.memory_space<vmem>>, vector<1x128xf32>
    %12 = vector.broadcast %11 : vector<1x128xf32> to vector<8x128xf32>
    %13 = arith.mulf %10, %12 : vector<8x128xf32>
    %cst_9 = arith.constant dense<0.000000e+00> : vector<8xf32>
    %14 = vector.multi_reduction <add>, %13, %cst_9 [1] : vector<8x128xf32> to vector<8xf32>
    %15 = vector.shape_cast %14 : vector<8xf32> to vector<8x1xf32>
    %c0_10 = arith.constant 0 : index
    %c0_11 = arith.constant 0 : index
    %16 = vector.load %arg5[%c0_10, %c0_11] : memref<1x1xf32, #tpu.memory_space<vmem>>, vector<1x1xf32>
    %17 = vector.broadcast %16 : vector<1x1xf32> to vector<8x1xf32>
    %18 = arith.addf %15, %17 : vector<8x1xf32>
    %cst_12 = arith.constant 0.000000e+00 : f32
    %19 = vector.broadcast %cst_12 : f32 to vector<8x1xf32>
    %20 = arith.subf %19, %18 : vector<8x1xf32>
    %21 = math.exp %20 : vector<8x1xf32>
    %cst_13 = arith.constant 1.000000e+00 : f32
    %22 = vector.broadcast %cst_13 : f32 to vector<8x1xf32>
    %23 = arith.addf %22, %21 : vector<8x1xf32>
    %24 = tpu.reciprocal %23 {approx = true} : vector<8x1xf32> -> vector<8x1xf32>
    %25 = vector.shape_cast %24 : vector<8x1xf32> to vector<1x8xf32>
    %c0_14 = arith.constant 0 : index
    %c0_15 = arith.constant 0 : index
    %26 = vector.load %arg6[%c0_14, %c0_15] : memref<1x8xf32, #tpu.memory_space<vmem>>, vector<1x8xf32>
    tpu.vector_store %arg6[%c0_14, %c0_15], %25 {strides = array<i32>} : memref<1x8xf32, #tpu.memory_space<vmem>>, vector<1x8xf32>,
    return
  }
  func.func @transform_0(%arg0: i32) -> (i32, i32) {
    %c0_i32 = arith.constant 0 : i32
    %c0_i32_0 = arith.constant 0 : i32
    return %arg0, %c0_i32 : i32, i32
  }
  func.func @transform_1(%arg0: i32) -> (i32, i32) {
    %c0_i32 = arith.constant 0 : i32
    %c0_i32_0 = arith.constant 0 : i32
    %c0_i32_1 = arith.constant 0 : i32
    return %c0_i32, %c0_i32_0 : i32, i32
  }
  func.func @transform_2(%arg0: i32) -> (i32, i32) {
    %c0_i32 = arith.constant 0 : i32
    %c0_i32_0 = arith.constant 0 : i32
    %c0_i32_1 = arith.constant 0 : i32
    return %c0_i32, %c0_i32_0 : i32, i32
  }
  func.func @transform_3(%arg0: i32) -> (i32, i32) {
    %c0_i32 = arith.constant 0 : i32
    %c0_i32_0 = arith.constant 0 : i32
    %c0_i32_1 = arith.constant 0 : i32
    return %c0_i32, %c0_i32_0 : i32, i32
  }
  func.func @transform_4(%arg0: i32) -> (i32, i32) {
    %c0_i32 = arith.constant 0 : i32
    %c0_i32_0 = arith.constant 0 : i32
    %c0_i32_1 = arith.constant 0 : i32
    return %c0_i32, %c0_i32_0 : i32, i32
  }
  func.func @transform_5(%arg0: i32) -> (i32, i32) {
    %c0_i32 = arith.constant 0 : i32
    %c0_i32_0 = arith.constant 0 : i32
    return %c0_i32, %arg0 : i32, i32
  }
}

</mosaic_0001>

<llo_original>
// kernel: tpu_custom_call.1
$region0: #{tpu_custom_call.1}
  #allocation0 [shape = 'u32[]', space=smem, size = 0x4, offset = 0x4, fixed_abs, tag = 'smem constant byte address 0x4 - core index']
  #allocation1 [shape = 'u32[144,128]{1,0:T(1,128)}', space=vmem, size = 0x12000, scoped, tag = 'internal scratch']
  #allocation2 [shape = 'f32[1,1]{1,0:T(1,128)S(1)}', space=vmem, size = 0x200, scoped, tag = 'scoped memory for tpu_custom_call.1']
  %s0 = inlined_call_operand.hbm [shape: bf16[8,896], index: 0, kind: input, shape index: {}]
  %s1 = inlined_call_operand.hbm [shape: bf16[896,128], index: 1, kind: input, shape index: {}]
  %s2 = inlined_call_operand.vmem [shape: f32[1,128], index: 2, kind: input, shape index: {}]
  %s3 = inlined_call_operand.vmem [shape: f32[1,128], index: 3, kind: input, shape index: {}]
  %s4 = inlined_call_operand.<no memory space> [shape: f32[1,1], index: 4, kind: input, shape index: {}]
  %s5 = inlined_call_operand.hbm [shape: f32[1,8], index: 5, kind: output, shape index: {}]
  %s6 = sld [smem:[#allocation0]]
  $region38: #{tpu_custom_call.1} parent=0
    _
  %s8 = ssub.s32 1, %s6
  %s9 = scalar_select 0, %s8, %s6
  %v10 = vstv %s4
  %11 = vst [vmem:[#allocation2] sm:$0x1] %v10
  $region1: #{tpu_custom_call.1} parent=0
    #allocation3 [shape = 'u8[14336]{0}', space=vmem, size = 0x3800, scoped, tag = 'input window, operand 0, single buffered']
    #allocation4 [shape = 's32[1]{0}', space=sflag, size = 0x4, scoped, tag = 'scoped memory for tpu_custom_call.1']
    #allocation5 [shape = 's32[1]{0}', space=sflag, size = 0x4, scoped, tag = 'scoped memory for tpu_custom_call.1']
    #allocation6 [shape = 'u8[229376]{0}', space=vmem, size = 0x38000, scoped, tag = 'input window, operand 1, single buffered']
    #allocation7 [shape = 's32[1]{0}', space=sflag, size = 0x4, scoped, tag = 'scoped memory for tpu_custom_call.1']
    #allocation8 [shape = 'u8[512]{0}', space=vmem, size = 0x400, scoped, tag = 'output window, operand 0, single buffered']
    %12 = vsyncpa [#allocation4], 0
    %13 = vsyncpa [#allocation7], 0
    %14 = vsyncpa [#allocation5], 0
    // Predicated region
    $region2: #{tpu_custom_call.1} parent=1 // pred_check
      _
    $region3: #{tpu_custom_call.1} parent=1 // pred_check_branch
      %16 = sbr.rel (0) target = $region5
    $region4: #{tpu_custom_call.1} parent=1 // pred_region
      %s18 = ssub.s32 448, 448
      %19 = vsyncadd [#allocation4], %s18
      %s21 = sshll.u32 [#allocation3], 4
      %s22 = int_to_ptr.vmem [resolvable:$true] %s21
      %24 = dma.hbm_to_vmem [thread:$0]  %s0, 448, %s22, [#allocation4]
    $region5: #{tpu_custom_call.1} parent=1 // pred_fallthru
      _
    // Predicated region
    $region6: #{tpu_custom_call.1} parent=1 // pred_check
      _
    $region7: #{tpu_custom_call.1} parent=1 // pred_check_branch
      %26 = sbr.rel (0) target = $region9
    $region8: #{tpu_custom_call.1} parent=1 // pred_region
      %s28 = ssub.s32 7168, 7168
      %29 = vsyncadd [#allocation7], %s28
      %s30 = sshll.u32 [#allocation6], 4
      %s31 = int_to_ptr.vmem [resolvable:$true] %s30
      %36 = dma.hbm_to_vmem [thread:$0]  %s1, 7168, %s31, [#allocation7], 64, 64, 4
    $region9: #{tpu_custom_call.1} parent=1 // pred_fallthru
      _
    // Predicated region
    $region10: #{tpu_custom_call.1} parent=1 // pred_check
      _
    $region11: #{tpu_custom_call.1} parent=1 // pred_check_branch
      %38 = sbr.rel (0) target = $region13
    $region12: #{tpu_custom_call.1} parent=1 // pred_region
      _
    $region13: #{tpu_custom_call.1} parent=1 // pred_fallthru
      _
    // Predicated region
    $region14: #{tpu_custom_call.1} parent=1 // pred_check
      _
    $region15: #{tpu_custom_call.1} parent=1 // pred_check_branch
      %40 = sbr.rel (0) target = $region17
    $region16: #{tpu_custom_call.1} parent=1 // pred_region
      _
    $region17: #{tpu_custom_call.1} parent=1 // pred_fallthru
      _
    // Predicated region
    $region18: #{tpu_custom_call.1} parent=1 // pred_check
      _
    $region19: #{tpu_custom_call.1} parent=1 // pred_check_branch
      %42 = sbr.rel (0) target = $region21
    $region20: #{tpu_custom_call.1} parent=1 // pred_region
      _
    $region21: #{tpu_custom_call.1} parent=1 // pred_fallthru
      _
    // Predicated region
    $region22: #{tpu_custom_call.1} parent=1 // pred_check
      _
    $region23: #{tpu_custom_call.1} parent=1 // pred_check_branch
      %44 = sbr.rel (0) target = $region25
    $region24: #{tpu_custom_call.1} parent=1 // pred_region
      %45 = dma.done [#allocation4], 448
    $region25: #{tpu_custom_call.1} parent=1 // pred_fallthru
      _
    // Predicated region
    $region26: #{tpu_custom_call.1} parent=1 // pred_check
      _
    $region27: #{tpu_custom_call.1} parent=1 // pred_check_branch
      %47 = sbr.rel (0) target = $region29
    $region28: #{tpu_custom_call.1} parent=1 // pred_region
      %48 = dma.done [#allocation7], 7168
    $region29: #{tpu_custom_call.1} parent=1 // pred_fallthru
      _
    %v50 = vld [vmem:[#allocation3] sm:$0xff]
    %v51 = vld [vmem:[#allocation3 + $0x8] sm:$0xff]
    %v52 = vld [vmem:[#allocation3 + $0x10] sm:$0xff]
    %v53 = vld [vmem:[#allocation3 + $0x18] sm:$0xf]
    %v54 = vld [vmem:[#allocation6] sm:$0xf]
    %v55 = vld [vmem:[#allocation6 + $0x4] sm:$0xf]
    %v56 = vld [vmem:[#allocation6 + $0x8] sm:$0xf]
    %v57 = vld [vmem:[#allocation6 + $0xc] sm:$0xf]
    %v58 = vld [vmem:[#allocation6 + $0x10] sm:$0xf]
    %v59 = vld [vmem:[#allocation6 + $0x14] sm:$0xf]
    %v60 = vld [vmem:[#allocation6 + $0x18] sm:$0xf]
    %v61 = vld [vmem:[#allocation6 + $0x1c] sm:$0xf]
    %v62 = vld [vmem:[#allocation6 + $0x20] sm:$0xf]
    %v63 = vld [vmem:[#allocation6 + $0x24] sm:$0xf]
    %v64 = vld [vmem:[#allocation6 + $0x28] sm:$0xf]
    %v65 = vld [vmem:[#allocation6 + $0x2c] sm:$0xf]
    %v66 = vld [vmem:[#allocation6 + $0x30] sm:$0xf]
    %v67 = vld [vmem:[#allocation6 + $0x34] sm:$0xf]
    %v68 = vld [vmem:[#allocation6 + $0x38] sm:$0xf]
    %v69 = vld [vmem:[#allocation6 + $0x3c] sm:$0xf]
    %v70 = vld [vmem:[#allocation6 + $0x40] sm:$0xf]
    %v71 = vld [vmem:[#allocation6 + $0x44] sm:$0xf]
    %v72 = vld [vmem:[#allocation6 + $0x48] sm:$0xf]
    %v73 = vld [vmem:[#allocation6 + $0x4c] sm:$0xf]
    %v74 = vld [vmem:[#allocation6 + $0x50] sm:$0xf]
    %v75 = vld [vmem:[#allocation6 + $0x54] sm:$0xf]
    %v76 = vld [vmem:[#allocation6 + $0x58] sm:$0xf]
    %v77 = vld [vmem:[#allocation6 + $0x5c] sm:$0xf]
    %v78 = vld [vmem:[#allocation6 + $0x60] sm:$0xf]
    %v79 = vld [vmem:[#allocation6 + $0x64] sm:$0xf]
    %v80 = vld [vmem:[#allocation6 + $0x68] sm:$0xf]
    %v81 = vld [vmem:[#allocation6 + $0x6c] sm:$0xf]
    %v82 = vld [vmem:[#allocation6 + $0x70] sm:$0xf]
    %v83 = vld [vmem:[#allocation6 + $0x74] sm:$0xf]
    %v84 = vld [vmem:[#allocation6 + $0x78] sm:$0xf]
    %v85 = vld [vmem:[#allocation6 + $0x7c] sm:$0xf]
    %v86 = vld [vmem:[#allocation6 + $0x80] sm:$0xf]
    %v87 = vld [vmem:[#allocation6 + $0x84] sm:$0xf]
    %v88 = vld [vmem:[#allocation6 + $0x88] sm:$0xf]
    %v89 = vld [vmem:[#allocation6 + $0x8c] sm:$0xf]
    %v90 = vld [vmem:[#allocation6 + $0x90] sm:$0xf]
    %v91 = vld [vmem:[#allocation6 + $0x94] sm:$0xf]
    %v92 = vld [vmem:[#allocation6 + $0x98] sm:$0xf]
    %v93 = vld [vmem:[#allocation6 + $0x9c] sm:$0xf]
    %v94 = vld [vmem:[#allocation6 + $0xa0] sm:$0xf]
    %v95 = vld [vmem:[#allocation6 + $0xa4] sm:$0xf]
    %v96 = vld [vmem:[#allocation6 + $0xa8] sm:$0xf]
    %v97 = vld [vmem:[#allocation6 + $0xac] sm:$0xf]
    %v98 = vld [vmem:[#allocation6 + $0xb0] sm:$0xf]
    %v99 = vld [vmem:[#allocation6 + $0xb4] sm:$0xf]
    %v100 = vld [vmem:[#allocation6 + $0xb8] sm:$0xf]
    %v101 = vld [vmem:[#allocation6 + $0xbc] sm:$0xf]
    %v102 = vld [vmem:[#allocation6 + $0xc0] sm:$0xf]
    %v103 = vld [vmem:[#allocation6 + $0xc4] sm:$0xf]
    %v104 = vld [vmem:[#allocation6 + $0xc8] sm:$0xf]
    %v105 = vld [vmem:[#allocation6 + $0xcc] sm:$0xf]
    %v106 = vld [vmem:[#allocation6 + $0xd0] sm:$0xf]
    %v107 = vld [vmem:[#allocation6 + $0xd4] sm:$0xf]
    %v108 = vld [vmem:[#allocation6 + $0xd8] sm:$0xf]
    %v109 = vld [vmem:[#allocation6 + $0xdc] sm:$0xf]
    %v110 = vld [vmem:[#allocation6 + $0xe0] sm:$0xf]
    %v111 = vld [vmem:[#allocation6 + $0xe4] sm:$0xf]
    %v112 = vld [vmem:[#allocation6 + $0xe8] sm:$0xf]
    %v113 = vld [vmem:[#allocation6 + $0xec] sm:$0xf]
    %v114 = vld [vmem:[#allocation6 + $0xf0] sm:$0xf]
    %v115 = vld [vmem:[#allocation6 + $0xf4] sm:$0xf]
    %v116 = vld [vmem:[#allocation6 + $0xf8] sm:$0xf]
    %v117 = vld [vmem:[#allocation6 + $0xfc] sm:$0xf]
    %v118 = vld [vmem:[#allocation6 + $0x100] sm:$0xf]
    %v119 = vld [vmem:[#allocation6 + $0x104] sm:$0xf]
    %v120 = vld [vmem:[#allocation6 + $0x108] sm:$0xf]
    %v121 = vld [vmem:[#allocation6 + $0x10c] sm:$0xf]
    %v122 = vld [vmem:[#allocation6 + $0x110] sm:$0xf]
    %v123 = vld [vmem:[#allocation6 + $0x114] sm:$0xf]
    %v124 = vld [vmem:[#allocation6 + $0x118] sm:$0xf]
    %v125 = vld [vmem:[#allocation6 + $0x11c] sm:$0xf]
    %v126 = vld [vmem:[#allocation6 + $0x120] sm:$0xf]
    %v127 = vld [vmem:[#allocation6 + $0x124] sm:$0xf]
    %v128 = vld [vmem:[#allocation6 + $0x128] sm:$0xf]
    %v129 = vld [vmem:[#allocation6 + $0x12c] sm:$0xf]
    %v130 = vld [vmem:[#allocation6 + $0x130] sm:$0xf]
    %v131 = vld [vmem:[#allocation6 + $0x134] sm:$0xf]
    %v132 = vld [vmem:[#allocation6 + $0x138] sm:$0xf]
    %v133 = vld [vmem:[#allocation6 + $0x13c] sm:$0xf]
    %v134 = vld [vmem:[#allocation6 + $0x140] sm:$0xf]
    %v135 = vld [vmem:[#allocation6 + $0x144] sm:$0xf]
    %v136 = vld [vmem:[#allocation6 + $0x148] sm:$0xf]
    %v137 = vld [vmem:[#allocation6 + $0x14c] sm:$0xf]
    %v138 = vld [vmem:[#allocation6 + $0x150] sm:$0xf]
    %v139 = vld [vmem:[#allocation6 + $0x154] sm:$0xf]
    %v140 = vld [vmem:[#allocation6 + $0x158] sm:$0xf]
    %v141 = vld [vmem:[#allocation6 + $0x15c] sm:$0xf]
    %v142 = vld [vmem:[#allocation6 + $0x160] sm:$0xf]
    %v143 = vld [vmem:[#allocation6 + $0x164] sm:$0xf]
    %v144 = vld [vmem:[#allocation6 + $0x168] sm:$0xf]
    %v145 = vld [vmem:[#allocation6 + $0x16c] sm:$0xf]
    %v146 = vld [vmem:[#allocation6 + $0x170] sm:$0xf]
    %v147 = vld [vmem:[#allocation6 + $0x174] sm:$0xf]
    %v148 = vld [vmem:[#allocation6 + $0x178] sm:$0xf]
    %v149 = vld [vmem:[#allocation6 + $0x17c] sm:$0xf]
    %v150 = vld [vmem:[#allocation6 + $0x180] sm:$0xf]
    %v151 = vld [vmem:[#allocation6 + $0x184] sm:$0xf]
    %v152 = vld [vmem:[#allocation6 + $0x188] sm:$0xf]
    %v153 = vld [vmem:[#allocation6 + $0x18c] sm:$0xf]
    %v154 = vld [vmem:[#allocation6 + $0x190] sm:$0xf]
    %v155 = vld [vmem:[#allocation6 + $0x194] sm:$0xf]
    %v156 = vld [vmem:[#allocation6 + $0x198] sm:$0xf]
    %v157 = vld [vmem:[#allocation6 + $0x19c] sm:$0xf]
    %v158 = vld [vmem:[#allocation6 + $0x1a0] sm:$0xf]
    %v159 = vld [vmem:[#allocation6 + $0x1a4] sm:$0xf]
    %v160 = vld [vmem:[#allocation6 + $0x1a8] sm:$0xf]
    %v161 = vld [vmem:[#allocation6 + $0x1ac] sm:$0xf]
    %v162 = vld [vmem:[#allocation6 + $0x1b0] sm:$0xf]
    %v163 = vld [vmem:[#allocation6 + $0x1b4] sm:$0xf]
    %v164 = vld [vmem:[#allocation6 + $0x1b8] sm:$0xf]
    %v165 = vld [vmem:[#allocation6 + $0x1bc] sm:$0xf]
    %v166 = vld [vmem:[%s2] sm:$0x1]
    %v168 = vlaneseq
    %v169 = vshrl.u32 %v168, 7
    %v170 = vsub.s32 0, %v169
    %v171 = vrot.slane %v166, %v170
    %v177 = vunpack.c.l.b16 %v50
    %v178 = vunpack.c.h.b16 %v50
    %v179 = vunpack.c.l.b16 %v51
    %v180 = vunpack.c.h.b16 %v51
    %v181 = vunpack.c.l.b16 %v52
    %v182 = vunpack.c.h.b16 %v52
    %v183 = vunpack.c.l.b16 %v53
    %v184 = vpack.c.b16 %v177, %v177
    %v185 = vpack.c.b16 %v178, %v178
    %v186 = vpack.c.b16 %v179, %v179
    %v187 = vpack.c.b16 %v180, %v180
    %v188 = vpack.c.b16 %v181, %v181
    %v189 = vpack.c.b16 %v182, %v182
    %v190 = vpack.c.b16 %v183, %v183
    %v310 = vunpack.c.l.b16 %v54
    %v311 = vunpack.c.l.b16 %v55
    %v312 = vunpack.c.l.b16 %v56
    %v313 = vunpack.c.l.b16 %v57
    %v314 = vunpack.c.l.b16 %v58
    %v315 = vunpack.c.l.b16 %v59
    %v316 = vunpack.c.l.b16 %v60
    %v317 = vunpack.c.l.b16 %v61
    %v318 = vunpack.c.l.b16 %v62
    %v319 = vunpack.c.l.b16 %v63
    %v320 = vunpack.c.l.b16 %v64
    %v321 = vunpack.c.l.b16 %v65
    %v322 = vunpack.c.l.b16 %v66
    %v323 = vunpack.c.l.b16 %v67
    %v324 = vunpack.c.l.b16 %v68
    %v325 = vunpack.c.l.b16 %v69
    %v326 = vunpack.c.l.b16 %v70
    %v327 = vunpack.c.l.b16 %v71
    %v328 = vunpack.c.l.b16 %v72
    %v329 = vunpack.c.l.b16 %v73
    %v330 = vunpack.c.l.b16 %v74
    %v331 = vunpack.c.l.b16 %v75
    %v332 = vunpack.c.l.b16 %v76
    %v333 = vunpack.c.l.b16 %v77
    %v334 = vunpack.c.l.b16 %v78
    %v335 = vunpack.c.l.b16 %v79
    %v336 = vunpack.c.l.b16 %v80
    %v337 = vunpack.c.l.b16 %v81
    %v338 = vunpack.c.l.b16 %v82
    %v339 = vunpack.c.l.b16 %v83
    %v340 = vunpack.c.l.b16 %v84
    %v341 = vunpack.c.l.b16 %v85
    %v342 = vunpack.c.l.b16 %v86
    %v343 = vunpack.c.l.b16 %v87
    %v344 = vunpack.c.l.b16 %v88
    %v345 = vunpack.c.l.b16 %v89
    %v346 = vunpack.c.l.b16 %v90
    %v347 = vunpack.c.l.b16 %v91
    %v348 = vunpack.c.l.b16 %v92
    %v349 = vunpack.c.l.b16 %v93
    %v350 = vunpack.c.l.b16 %v94
    %v351 = vunpack.c.l.b16 %v95
    %v352 = vunpack.c.l.b16 %v96
    %v353 = vunpack.c.l.b16 %v97
    %v354 = vunpack.c.l.b16 %v98
    %v355 = vunpack.c.l.b16 %v99
    %v356 = vunpack.c.l.b16 %v100
    %v357 = vunpack.c.l.b16 %v101
    %v358 = vunpack.c.l.b16 %v102
    %v359 = vunpack.c.l.b16 %v103
    %v360 = vunpack.c.l.b16 %v104
    %v361 = vunpack.c.l.b16 %v105
    %v362 = vunpack.c.l.b16 %v106
    %v363 = vunpack.c.l.b16 %v107
    %v364 = vunpack.c.l.b16 %v108
    %v365 = vunpack.c.l.b16 %v109
    %v366 = vunpack.c.l.b16 %v110
    %v367 = vunpack.c.l.b16 %v111
    %v368 = vunpack.c.l.b16 %v112
    %v369 = vunpack.c.l.b16 %v113
    %v370 = vunpack.c.l.b16 %v114
    %v371 = vunpack.c.l.b16 %v115
    %v372 = vunpack.c.l.b16 %v116
    %v373 = vunpack.c.l.b16 %v117
    %v374 = vunpack.c.l.b16 %v118
    %v375 = vunpack.c.l.b16 %v119
    %v376 = vunpack.c.l.b16 %v120
    %v377 = vunpack.c.l.b16 %v121
    %v378 = vunpack.c.l.b16 %v122
    %v379 = vunpack.c.l.b16 %v123
    %v380 = vunpack.c.l.b16 %v124
    %v381 = vunpack.c.l.b16 %v125
    %v382 = vunpack.c.l.b16 %v126
    %v383 = vunpack.c.l.b16 %v127
    %v384 = vunpack.c.l.b16 %v128
    %v385 = vunpack.c.l.b16 %v129
    %v386 = vunpack.c.l.b16 %v130
    %v387 = vunpack.c.l.b16 %v131
    %v388 = vunpack.c.l.b16 %v132
    %v389 = vunpack.c.l.b16 %v133
    %v390 = vunpack.c.l.b16 %v134
    %v391 = vunpack.c.l.b16 %v135
    %v392 = vunpack.c.l.b16 %v136
    %v393 = vunpack.c.l.b16 %v137
    %v394 = vunpack.c.l.b16 %v138
    %v395 = vunpack.c.l.b16 %v139
    %v396 = vunpack.c.l.b16 %v140
    %v397 = vunpack.c.l.b16 %v141
    %v398 = vunpack.c.l.b16 %v142
    %v399 = vunpack.c.l.b16 %v143
    %v400 = vunpack.c.l.b16 %v144
    %v401 = vunpack.c.l.b16 %v145
    %v402 = vunpack.c.l.b16 %v146
    %v403 = vunpack.c.l.b16 %v147
    %v404 = vunpack.c.l.b16 %v148
    %v405 = vunpack.c.l.b16 %v149
    %v406 = vunpack.c.l.b16 %v150
    %v407 = vunpack.c.l.b16 %v151
    %v408 = vunpack.c.l.b16 %v152
    %v409 = vunpack.c.l.b16 %v153
    %v410 = vunpack.c.l.b16 %v154
    %v411 = vunpack.c.l.b16 %v155
    %v412 = vunpack.c.l.b16 %v156
    %v413 = vunpack.c.l.b16 %v157
    %v414 = vunpack.c.l.b16 %v158
    %v415 = vunpack.c.l.b16 %v159
    %v416 = vunpack.c.l.b16 %v160
    %v417 = vunpack.c.l.b16 %v161
    %v418 = vunpack.c.l.b16 %v162
    %v419 = vunpack.c.l.b16 %v163
    %v420 = vunpack.c.l.b16 %v164
    %v421 = vunpack.c.l.b16 %v165
    %v422 = vpack.c.b16 %v311, %v310
    %v423 = vpack.c.b16 %v313, %v312
    %v424 = vpack.c.b16 %v315, %v314
    %v425 = vpack.c.b16 %v317, %v316
    %v426 = vpack.c.b16 %v319, %v318
    %v427 = vpack.c.b16 %v321, %v320
    %v428 = vpack.c.b16 %v323, %v322
    %v429 = vpack.c.b16 %v325, %v324
    %v430 = vpack.c.b16 %v327, %v326
    %v431 = vpack.c.b16 %v329, %v328
    %v432 = vpack.c.b16 %v331, %v330
    %v433 = vpack.c.b16 %v333, %v332
    %v434 = vpack.c.b16 %v335, %v334
    %v435 = vpack.c.b16 %v337, %v336
    %v436 = vpack.c.b16 %v339, %v338
    %v437 = vpack.c.b16 %v341, %v340
    %v438 = vpack.c.b16 %v343, %v342
    %v439 = vpack.c.b16 %v345, %v344
    %v440 = vpack.c.b16 %v347, %v346
    %v441 = vpack.c.b16 %v349, %v348
    %v442 = vpack.c.b16 %v351, %v350
    %v443 = vpack.c.b16 %v353, %v352
    %v444 = vpack.c.b16 %v355, %v354
    %v445 = vpack.c.b16 %v357, %v356
    %v446 = vpack.c.b16 %v359, %v358
    %v447 = vpack.c.b16 %v361, %v360
    %v448 = vpack.c.b16 %v363, %v362
    %v449 = vpack.c.b16 %v365, %v364
    %v450 = vpack.c.b16 %v367, %v366
    %v451 = vpack.c.b16 %v369, %v368
    %v452 = vpack.c.b16 %v371, %v370
    %v453 = vpack.c.b16 %v373, %v372
    %v454 = vpack.c.b16 %v375, %v374
    %v455 = vpack.c.b16 %v377, %v376
    %v456 = vpack.c.b16 %v379, %v378
    %v457 = vpack.c.b16 %v381, %v380
    %v458 = vpack.c.b16 %v383, %v382
    %v459 = vpack.c.b16 %v385, %v384
    %v460 = vpack.c.b16 %v387, %v386
    %v461 = vpack.c.b16 %v389, %v388
    %v462 = vpack.c.b16 %v391, %v390
    %v463 = vpack.c.b16 %v393, %v392
    %v464 = vpack.c.b16 %v395, %v394
    %v465 = vpack.c.b16 %v397, %v396
    %v466 = vpack.c.b16 %v399, %v398
    %v467 = vpack.c.b16 %v401, %v400
    %v468 = vpack.c.b16 %v403, %v402
    %v469 = vpack.c.b16 %v405, %v404
    %v470 = vpack.c.b16 %v407, %v406
    %v471 = vpack.c.b16 %v409, %v408
    %v472 = vpack.c.b16 %v411, %v410
    %v473 = vpack.c.b16 %v413, %v412
    %v474 = vpack.c.b16 %v415, %v414
    %v475 = vpack.c.b16 %v417, %v416
    %v476 = vpack.c.b16 %v419, %v418
    %v477 = vpack.c.b16 %v421, %v420
    %534 = vmatprep.subr.bf16.mxu0 0
    %535 = vmatpush1.bf16.msra.mxu0 %v429
    %536 = vmatprep.subr.bf16.mxu0 0
    %537 = vmatpush1.bf16.msra.mxu0 %v428
    %538 = vmatprep.subr.bf16.mxu0 0
    %539 = vmatpush1.bf16.msra.mxu0 %v427
    %540 = vmatprep.subr.bf16.mxu0 0
    %541 = vmatpush1.bf16.msra.mxu0 %v426
    %542 = vmatprep.subr.bf16.mxu0 0
    %543 = vmatpush1.bf16.msra.mxu0 %v425
    %544 = vmatprep.subr.bf16.mxu0 0
    %545 = vmatpush1.bf16.msra.mxu0 %v424
    %546 = vmatprep.subr.bf16.mxu0 0
    %547 = vmatpush1.bf16.msra.mxu0 %v423
    %548 = vmatprep.subr.bf16.mxu0 0
    %549 = vmatpush1.bf16.msra.mxu0 %v422
    %550 = vmatprep.subr.bf16.mxu0 0
    %551 = vmatpush2.bf16.msra.mxu0 %v437
    %552 = vmatprep.subr.bf16.mxu0 0
    %553 = vmatpush2.bf16.msra.mxu0 %v436
    %554 = vmatprep.subr.bf16.mxu0 0
    %555 = vmatpush2.bf16.msra.mxu0 %v435
    %556 = vmatprep.subr.bf16.mxu0 0
    %557 = vmatpush2.bf16.msra.mxu0 %v434
    %558 = vmatprep.subr.bf16.mxu0 0
    %559 = vmatpush2.bf16.msra.mxu0 %v433
    %560 = vmatprep.subr.bf16.mxu0 0
    %561 = vmatpush2.bf16.msra.mxu0 %v432
    %562 = vmatprep.subr.bf16.mxu0 0
    %563 = vmatpush2.bf16.msra.mxu0 %v431
    %564 = vmatprep.subr.bf16.mxu0 0
    %565 = vmatpush2.bf16.msra.mxu0 %v430
    %566 = vmatprep.mubr.bf16.mxu0 %v185
    %567 = vmatmul.mubr.bf16.gmra.mxu0 %v184
    %v568 = vpop.f32.mrf.mxu0
    %v569 = vadd.f32 %v171, %v568
    %v570 = vpop.f32.mrf.mxu0
    %v571 = vpop.f32.mrf.mxu0
    %v572 = vpop.f32.mrf.mxu0
    %573 = vdwg.mxu0
    %574 = vmatprep.subr.bf16.mxu0 0
    %575 = vmatpush1.bf16.msra.mxu0 %v445
    %576 = vmatprep.subr.bf16.mxu0 0
    %577 = vmatpush1.bf16.msra.mxu0 %v444
    %578 = vmatprep.subr.bf16.mxu0 0
    %579 = vmatpush1.bf16.msra.mxu0 %v443
    %580 = vmatprep.subr.bf16.mxu0 0
    %581 = vmatpush1.bf16.msra.mxu0 %v442
    %582 = vmatprep.subr.bf16.mxu0 0
    %583 = vmatpush1.bf16.msra.mxu0 %v441
    %584 = vmatprep.subr.bf16.mxu0 0
    %585 = vmatpush1.bf16.msra.mxu0 %v440
    %586 = vmatprep.subr.bf16.mxu0 0
    %587 = vmatpush1.bf16.msra.mxu0 %v439
    %588 = vmatprep.subr.bf16.mxu0 0
    %589 = vmatpush1.bf16.msra.mxu0 %v438
    %590 = vmatprep.subr.bf16.mxu0 0
    %591 = vmatpush2.bf16.msra.mxu0 %v453
    %592 = vmatprep.subr.bf16.mxu0 0
    %593 = vmatpush2.bf16.msra.mxu0 %v452
    %594 = vmatprep.subr.bf16.mxu0 0
    %595 = vmatpush2.bf16.msra.mxu0 %v451
    %596 = vmatprep.subr.bf16.mxu0 0
    %597 = vmatpush2.bf16.msra.mxu0 %v450
    %598 = vmatprep.subr.bf16.mxu0 0
    %599 = vmatpush2.bf16.msra.mxu0 %v449
    %600 = vmatprep.subr.bf16.mxu0 0
    %601 = vmatpush2.bf16.msra.mxu0 %v448
    %602 = vmatprep.subr.bf16.mxu0 0
    %603 = vmatpush2.bf16.msra.mxu0 %v447
    %604 = vmatprep.subr.bf16.mxu0 0
    %605 = vmatpush2.bf16.msra.mxu0 %v446
    %606 = vmatprep.mubr.bf16.mxu0 %v187
    %607 = vmatmul.mubr.bf16.gmra.mxu0 %v186
    %v608 = vpop.f32.mrf.mxu0
    %v609 = vadd.f32 %v569, %v608
    %v610 = vpop.f32.mrf.mxu0
    %v611 = vpop.f32.mrf.mxu0
    %v612 = vpop.f32.mrf.mxu0
    %613 = vdwg.mxu0
    %614 = vmatprep.subr.bf16.mxu0 0
    %615 = vmatpush1.bf16.msra.mxu0 %v461
    %616 = vmatprep.subr.bf16.mxu0 0
    %617 = vmatpush1.bf16.msra.mxu0 %v460
    %618 = vmatprep.subr.bf16.mxu0 0
    %619 = vmatpush1.bf16.msra.mxu0 %v459
    %620 = vmatprep.subr.bf16.mxu0 0
    %621 = vmatpush1.bf16.msra.mxu0 %v458
    %622 = vmatprep.subr.bf16.mxu0 0
    %623 = vmatpush1.bf16.msra.mxu0 %v457
    %624 = vmatprep.subr.bf16.mxu0 0
    %625 = vmatpush1.bf16.msra.mxu0 %v456
    %626 = vmatprep.subr.bf16.mxu0 0
    %627 = vmatpush1.bf16.msra.mxu0 %v455
    %628 = vmatprep.subr.bf16.mxu0 0
    %629 = vmatpush1.bf16.msra.mxu0 %v454
    %630 = vmatprep.subr.bf16.mxu0 0
    %631 = vmatpush2.bf16.msra.mxu0 %v469
    %632 = vmatprep.subr.bf16.mxu0 0
    %633 = vmatpush2.bf16.msra.mxu0 %v468
    %634 = vmatprep.subr.bf16.mxu0 0
    %635 = vmatpush2.bf16.msra.mxu0 %v467
    %636 = vmatprep.subr.bf16.mxu0 0
    %637 = vmatpush2.bf16.msra.mxu0 %v466
    %638 = vmatprep.subr.bf16.mxu0 0
    %639 = vmatpush2.bf16.msra.mxu0 %v465
    %640 = vmatprep.subr.bf16.mxu0 0
    %641 = vmatpush2.bf16.msra.mxu0 %v464
    %642 = vmatprep.subr.bf16.mxu0 0
    %643 = vmatpush2.bf16.msra.mxu0 %v463
    %644 = vmatprep.subr.bf16.mxu0 0
    %645 = vmatpush2.bf16.msra.mxu0 %v462
    %646 = vmatprep.mubr.bf16.mxu0 %v189
    %647 = vmatmul.mubr.bf16.gmra.mxu0 %v188
    %v648 = vpop.f32.mrf.mxu0
    %v649 = vadd.f32 %v609, %v648
    %v650 = vpop.f32.mrf.mxu0
    %v651 = vpop.f32.mrf.mxu0
    %v652 = vpop.f32.mrf.mxu0
    %653 = vdwg.mxu0
    %654 = vmatprep.subr.bf16.mxu0 0
    %655 = vmatpush1.bf16.msra.mxu0 %v477
    %656 = vmatprep.subr.bf16.mxu0 0
    %657 = vmatpush1.bf16.msra.mxu0 %v476
    %658 = vmatprep.subr.bf16.mxu0 0
    %659 = vmatpush1.bf16.msra.mxu0 %v475
    %660 = vmatprep.subr.bf16.mxu0 0
    %661 = vmatpush1.bf16.msra.mxu0 %v474
    %662 = vmatprep.subr.bf16.mxu0 0
    %663 = vmatpush1.bf16.msra.mxu0 %v473
    %664 = vmatprep.subr.bf16.mxu0 0
    %665 = vmatpush1.bf16.msra.mxu0 %v472
    %666 = vmatprep.subr.bf16.mxu0 0
    %667 = vmatpush1.bf16.msra.mxu0 %v471
    %668 = vmatprep.subr.bf16.mxu0 0
    %669 = vmatpush1.bf16.msra.mxu0 %v470
    %670 = vmatprep.subr.bf16.mxu0 0
    %671 = vmatpush2.bf16.msra.mxu0 0
    %672 = vmatprep.subr.bf16.mxu0 0
    %673 = vmatpush2.bf16.msra.mxu0 0
    %674 = vmatprep.subr.bf16.mxu0 0
    %675 = vmatpush2.bf16.msra.mxu0 0
    %676 = vmatprep.subr.bf16.mxu0 0
    %677 = vmatpush2.bf16.msra.mxu0 0
    %678 = vmatprep.subr.bf16.mxu0 0
    %679 = vmatpush2.bf16.msra.mxu0 0
    %680 = vmatprep.subr.bf16.mxu0 0
    %681 = vmatpush2.bf16.msra.mxu0 0
    %682 = vmatprep.subr.bf16.mxu0 0
    %683 = vmatpush2.bf16.msra.mxu0 0
    %684 = vmatprep.subr.bf16.mxu0 0
    %685 = vmatpush2.bf16.msra.mxu0 0
    %686 = vmatprep.mubr.bf16.mxu0 0
    %687 = vmatmul.mubr.bf16.gmra.mxu0 %v190
    %v688 = vpop.f32.mrf.mxu0
    %v689 = vadd.f32 %v649, %v688
    %v690 = vpop.f32.mrf.mxu0
    %v691 = vpop.f32.mrf.mxu0
    %v692 = vpop.f32.mrf.mxu0
    %693 = vdwg.mxu0
    %vm694 = vcmp.gt.f32.partialorder %v689, 0.0
    %v695 = vmul.f32 %v689, 0.1
    %v696 = vsel %vm694, %v689, %v695
    %v697 = vld [vmem:[%s3] sm:$0x1]
    %v699 = vlaneseq
    %v700 = vshrl.u32 %v699, 7
    %v701 = vsub.s32 0, %v700
    %v702 = vrot.slane %v697, %v701
    %v704 = vmul.f32 %v696, %v702
    %705 = vadd.xlane.f32.xlu0 %v704
    %v706 = vpop.xlane.xlu0 %705
    %v707 = vld [vmem:[#allocation2] sm:$0x1]
    %v709 = vlaneseq
    %v710 = vshrl.u32 %v709, 7
    %v711 = vsub.s32 0, %v710
    %v712 = vrot.slane %v707, %v711
    %v714 = vadd.f32 %v706, %v712
    %v715 = vsub.f32 0.0, %v714
    %v716 = vmul.f32 %v715, 1.442695
    %v717 = vpow.pop %v716
    %v718 = vadd.f32 %v717, 1.0
    %v719 = vrcp.pop %v718
    %721 = vset.pattern.permute.xlu0 0
    %722 = vperm.xlu0 %721, %v719
    %v723 = vpop.permute.xlu0 %722
    %v724 = vlaneseq
    %v725 = vand.u32 %v724, 127
    %v726 = vlaneseq
    %v727 = vshrl.u32 %v726, 7
    %v728 = vsub.s32 %v725, %v727
    %v729 = vrot.slane %v723, %v728
    %vm731 = vcmask 57344
    %732 = vst.msk [vmem:[#allocation8] sm:$0x1] %vm731, %v729
    // Predicated region
    $region30: #{tpu_custom_call.1} parent=1 // pred_check
      _
    $region31: #{tpu_custom_call.1} parent=1 // pred_check_branch
      %734 = sbr.rel (0) target = $region33
    $region32: #{tpu_custom_call.1} parent=1 // pred_region
      %s736 = ssub.s32 16, 16
      %737 = vsyncadd [#allocation5], %s736
      %s739 = sshll.u32 [#allocation8], 4
      %s740 = int_to_ptr.vmem [resolvable:$true] %s739
      %742 = dma.vmem_to_hbm [thread:$0]  %s740, 16, %s5, [#allocation5]
    $region33: #{tpu_custom_call.1} parent=1 // pred_fallthru
      _
    // Predicated region
    $region34: #{tpu_custom_call.1} parent=1 // pred_check
      _
    $region35: #{tpu_custom_call.1} parent=1 // pred_check_branch
      %744 = sbr.rel (0) target = $region37
    $region36: #{tpu_custom_call.1} parent=1 // pred_region
      %745 = dma.done [#allocation5], 16
    $region37: #{tpu_custom_call.1} parent=1 // pred_fallthru
      _
    %746 = vsyncpa [#allocation4], 1
    %747 = vsyncpa [#allocation7], 1
    %748 = vsyncpa [#allocation5], 1

</llo_original>
